<compile_context>
chip_gen: v7x
topology: tpu7x:2x2x1
jax: 0.10.0
libtpu: 0.0.40
codegen_flags: <defaults>
</compile_context>

<pallas_src>
import functools

import jax
import jax.numpy as jnp
from jax.experimental import pallas as pl
from jax.experimental.pallas import tpu as pltpu


def _round_up(x, m):
    return ((x + m - 1) // m) * m


def _cdiv(a, b):
    return (a + b - 1) // b


def _default_vmem_limit():
    """~3/4 of physical VMEM, capped at 96 MiB (v7x has only 64 MiB/TC)."""
    try:
        cap = getattr(pltpu.get_tpu_info(), "vmem_capacity_bytes", None)
        if cap:
            return min(96 * 1024 * 1024, int(cap) * 3 // 4)
    except Exception:
        pass
    return 48 * 1024 * 1024


def _choose_block_b(batch, block_b, target_blocks=4):
    """Batch tile: multiple of 8 (sublane), <= block_b, and small enough that
    the grid has >= target_blocks steps (>=2 per TensorCore on v7x megacore)."""
    block_b = max(8, (block_b // 8) * 8)
    tb = _round_up(max(1, _cdiv(batch, target_blocks)), 8)
    tb = max(8, min(tb, block_b))
    if tb >= batch:
        return batch                     # single full-extent block (always legal)
    return tb                            # multiple of 8 -> legal partial tail


def moe_head_kernel(a_ref, b_ref, wa_ref, wb_ref, bg_ref, bc_ref,
                    logits_ref, combined_ref, *, p, h1):
    """Fused gate + weighted-combine + classifier for one batch tile.

    a_ref:  (TB, H1)       embedding tile from base model 1
    b_ref:  (TB, H2)       embedding tile from base model 2
    wa_ref: (H1, Npad)     [gate_A | clf_A | 0-pad]   (Npad = round_up(P+2, 128))
    wb_ref: (H2, Npad)     [gate_B | clf_B | 0-pad]
    bg_ref: (1,  P)        gate bias
    bc_ref: (1,  2)        classifier bias
    logits_ref:   (TB, 2)
    combined_ref: (TB, H1+H2)
    """
    a = a_ref[...]
    b = b_ref[...]

    # One fused MXU matmul per embedding, in the weights' (bf16) dtype with f32
    # accumulation:
    #   columns [0:P]    -> gate-projection partial sums
    #   columns [P:P+2]  -> classifier partial sums (a@WcA / b@WcB)
    fa = jnp.dot(a.astype(wa_ref.dtype), wa_ref[...],
                 preferred_element_type=jnp.float32)
    fb = jnp.dot(b.astype(wb_ref.dtype), wb_ref[...],
                 preferred_element_type=jnp.float32)

    # --- gate softmax over the P projection columns (f32 on the VPU/EUP) ---
    proj = fa[:, :p] + fb[:, :p] + bg_ref[...]
    proj_max = jnp.max(proj, axis=1, keepdims=True)
    e = jnp.exp(proj - proj_max)
    denom = jnp.sum(e, axis=1, keepdims=True)
    inv = pl.reciprocal(denom, approx=False)
    # Only softmax columns 0/1 are ever used -> slice before the multiply.
    w_a = e[:, 0:1] * inv                     # (TB, 1)
    w_b = e[:, 1:2] * inv                     # (TB, 1)

    # --- weighted combine: two direct half stores, no concat temp ---
    combined_ref[:, :h1] = (a.astype(jnp.float32) * w_a).astype(combined_ref.dtype)
    combined_ref[:, h1:] = (b.astype(jnp.float32) * w_b).astype(combined_ref.dtype)

    # --- classifier, algebraically fused:  (wA*a)@WcA + (wB*b)@WcB + bc ---
    logits = w_a * fa[:, p:p + 2] + w_b * fb[:, p:p + 2] + bc_ref[...]
    logits_ref[...] = logits.astype(logits_ref.dtype)


def prepare_moe_params(wg, bg, wc, bc, h1, h2, matmul_dtype=jnp.bfloat16):
    """One-time (frozen-weight) preprocessing: split, transpose, fuse, lane-pad.

    wg: (P, H1+H2)  bg: (P,)   -- PyTorch nn.Linear layout (out, in)
    wc: (2, H1+H2)  bc: (2,)
    matmul_dtype: bf16 by default (fast MXU path); pass jnp.float32 for exact
                  parity with an f32 reference.
    Returns (wa (H1, Npad), wb (H2, Npad), bg2 (1, P), bc2 (1, 2)).
    """
    p, d = wg.shape
    assert d == h1 + h2 and wc.shape == (2, d)
    n_pad = _round_up(p + 2, 128)

    wga = jnp.transpose(wg[:, :h1]).astype(matmul_dtype)   # (H1, P)
    wgb = jnp.transpose(wg[:, h1:]).astype(matmul_dtype)   # (H2, P)
    wca = jnp.transpose(wc[:, :h1]).astype(matmul_dtype)   # (H1, 2)
    wcb = jnp.transpose(wc[:, h1:]).astype(matmul_dtype)   # (H2, 2)

    wa = jnp.zeros((h1, n_pad), matmul_dtype).at[:, :p].set(wga).at[:, p:p + 2].set(wca)
    wb = jnp.zeros((h2, n_pad), matmul_dtype).at[:, :p].set(wgb).at[:, p:p + 2].set(wcb)
    bg2 = bg.reshape(1, p).astype(jnp.float32)
    bc2 = bc.reshape(1, 2).astype(jnp.float32)
    return wa, wb, bg2, bc2


def moe_forward(emb_a, emb_b, params, *, block_b=512, vmem_limit_bytes=None,
                combined_dtype=jnp.float32, logits_dtype=jnp.float32):
    """Batch-tiled Pallas forward. Returns (logits (B, 2), combined (B, H1+H2))."""
    wa, wb, bg2, bc2 = params
    B, H1 = emb_a.shape
    _, H2 = emb_b.shape
    D = H1 + H2
    P = bg2.shape[1]
    n_pad = wa.shape[1]
    assert wa.shape == (H1, n_pad) and wb.shape == (H2, n_pad)

    # f32 resident weights double the (double-buffered) weight VMEM; keep the
    # tile small enough for the v7x 64 MiB budget in that case.
    if jnp.dtype(wa.dtype) == jnp.dtype(jnp.float32):
        block_b = min(block_b, 256)

    tb = _choose_block_b(B, block_b)
    grid = (pl.cdiv(B, tb),)

    if vmem_limit_bytes is None:
        vmem_limit_bytes = _default_vmem_limit()

    def _isz(dt):
        return jnp.dtype(dt).itemsize

    cost = pl.CostEstimate(
        flops=2 * B * (H1 + H2) * n_pad,
        transcendentals=B * P,
        bytes_accessed=(B * H1 * _isz(emb_a.dtype) + B * H2 * _isz(emb_b.dtype)
                        + H1 * n_pad * _isz(wa.dtype) + H2 * n_pad * _isz(wb.dtype)
                        + P * 4 + 2 * 4
                        + B * 2 * _isz(logits_dtype) + B * D * _isz(combined_dtype)),
    )

    kernel = functools.partial(moe_head_kernel, p=P, h1=H1)

    logits, combined = pl.pallas_call(
        kernel,
        out_shape=(
            jax.ShapeDtypeStruct((B, 2), logits_dtype),
            jax.ShapeDtypeStruct((B, D), combined_dtype),
        ),
        grid=grid,
        in_specs=[
            pl.BlockSpec((tb, H1), lambda i: (i, 0)),      # emb_A tile
            pl.BlockSpec((tb, H2), lambda i: (i, 0)),      # emb_B tile
            pl.BlockSpec((H1, n_pad), lambda i: (0, 0)),   # fused weights A (resident)
            pl.BlockSpec((H2, n_pad), lambda i: (0, 0)),   # fused weights B (resident)
            pl.BlockSpec((1, P), lambda i: (0, 0)),        # gate bias
            pl.BlockSpec((1, 2), lambda i: (0, 0)),        # classifier bias
        ],
        out_specs=(
            pl.BlockSpec((tb, 2), lambda i: (i, 0)),
            pl.BlockSpec((tb, D), lambda i: (i, 0)),
        ),
        compiler_params=pltpu.CompilerParams(
            dimension_semantics=("parallel",),             # shard batch tiles across TCs
            vmem_limit_bytes=vmem_limit_bytes,
        ),
        cost_estimate=cost,
    )(emb_a, emb_b, wa, wb, bg2, bc2)
    return logits, combined


def moe_forward_ref(emb_a, emb_b, wg, bg, wc, bc):
    """Pure-JAX reference mirroring the PyTorch forward exactly (all f32)."""
    combined_in = jnp.concatenate([emb_a, emb_b], axis=1)
    proj = combined_in @ wg.T + bg
    weights = jax.nn.softmax(proj, axis=1)
    w_a = weights[:, 0:1]
    w_b = weights[:, 1:2]
    combined = jnp.concatenate([emb_a * w_a, emb_b * w_b], axis=1)
    logits = combined @ wc.T + bc
    return logits, combined


if __name__ == "__main__":
    # Small synthetic shapes: batch=8, hidden_size1=hidden_size2=32.
    # TODO(synk): the frozen BERT/CodeBERT base encoders are not implemented here;
    # their pooled embeddings are the kernel inputs (as in the module's forward).
    B, H1, H2 = 8, 32, 32
    D = H1 + H2
    P = D // 2

    key = jax.random.PRNGKey(0)
    k1, k2, k3, k4, k5, k6 = jax.random.split(key, 6)

    emb_a = jax.random.normal(k1, (B, H1), dtype=jnp.float32)
    emb_b = jax.random.normal(k2, (B, H2), dtype=jnp.float32)

    # PyTorch nn.Linear parameter shapes: (out, in) weight + (out,) bias.
    wg = 0.05 * jax.random.normal(k3, (P, D), dtype=jnp.float32)
    bg = 0.01 * jax.random.normal(k4, (P,), dtype=jnp.float32)
    wc = 0.05 * jax.random.normal(k5, (2, D), dtype=jnp.float32)
    bc = 0.01 * jax.random.normal(k6, (2,), dtype=jnp.float32)

    logits_ref, combined_ref = moe_forward_ref(emb_a, emb_b, wg, bg, wc, bc)

    # --- f32 weights: tight parity check with the reference ---
    params_f32 = prepare_moe_params(wg, bg, wc, bc, H1, H2, matmul_dtype=jnp.float32)
    params_f32 = jax.block_until_ready(params_f32)
    logits32, combined32 = moe_forward(emb_a, emb_b, params_f32)
    jax.block_until_ready((logits32, combined32))
    assert jnp.allclose(logits32, logits_ref, atol=1e-5, rtol=1e-5)
    assert jnp.allclose(combined32, combined_ref, atol=1e-5, rtol=1e-5)

    # --- bf16 MXU weights (production default): relaxed tolerance ---
    params_bf16 = prepare_moe_params(wg, bg, wc, bc, H1, H2)   # bf16 matmul path
    params_bf16 = jax.block_until_ready(params_bf16)
    logits_bf, combined_bf = moe_forward(emb_a, emb_b, params_bf16)
    jax.block_until_ready((logits_bf, combined_bf))
    assert jnp.allclose(logits_bf, logits_ref, atol=5e-2, rtol=5e-2)
    assert jnp.allclose(combined_bf, combined_ref, atol=5e-2, rtol=5e-2)

    print("KERNEL_OK")
</pallas_src>

<mosaic_0001>
module attributes {stable_mosaic.version = 11 : i64} {
  func.func @moe_head_kernel(%arg0: i32, %arg1: memref<8x32xf32, #tpu.memory_space<vmem>>, %arg2: memref<8x32xf32, #tpu.memory_space<vmem>>, %arg3: memref<32x128xf32, #tpu.memory_space<vmem>>, %arg4: memref<32x128xf32, #tpu.memory_space<vmem>>, %arg5: memref<1x32xf32, #tpu.memory_space<vmem>>, %arg6: memref<1x2xf32, #tpu.memory_space<vmem>>, %arg7: memref<8x2xf32, #tpu.memory_space<vmem>>, %arg8: memref<8x64xf32, #tpu.memory_space<vmem>>) attributes {dimension_semantics = [#tpu.dimension_semantics<parallel>], iteration_bounds = array<i64: 1>, scalar_prefetch = 0 : i64, scratch_operands = 0 : i64, tpu.core_type = #tpu.core_type<tc>, window_params = [{transform_indices = @transform_0, window_bounds = array<i64: 8, 32>}, {transform_indices = @transform_1, window_bounds = array<i64: 8, 32>}, {pipeline_mode = #tpu.pipeline_mode<synchronous>, transform_indices = @transform_2, window_bounds = array<i64: 32, 128>}, {pipeline_mode = #tpu.pipeline_mode<synchronous>, transform_indices = @transform_3, window_bounds = array<i64: 32, 128>}, {pipeline_mode = #tpu.pipeline_mode<synchronous>, transform_indices = @transform_4, window_bounds = array<i64: 1, 32>}, {pipeline_mode = #tpu.pipeline_mode<synchronous>, transform_indices = @transform_5, window_bounds = array<i64: 1, 2>}, {transform_indices = @transform_6, window_bounds = array<i64: 8, 2>}, {transform_indices = @transform_7, window_bounds = array<i64: 8, 64>}]} {
    %c0 = arith.constant 0 : index
    %c0_0 = arith.constant 0 : index
    %0 = vector.load %arg1[%c0, %c0_0] : memref<8x32xf32, #tpu.memory_space<vmem>>, vector<8x32xf32>
    %c0_1 = arith.constant 0 : index
    %c0_2 = arith.constant 0 : index
    %1 = vector.load %arg2[%c0_1, %c0_2] : memref<8x32xf32, #tpu.memory_space<vmem>>, vector<8x32xf32>
    %c0_3 = arith.constant 0 : index
    %c0_4 = arith.constant 0 : index
    %2 = vector.load %arg3[%c0_3, %c0_4] : memref<32x128xf32, #tpu.memory_space<vmem>>, vector<32x128xf32>
    %cst = arith.constant dense<0.000000e+00> : vector<8x128xf32>
    %3 = tpu.matmul %0, %2, %cst {dimension_numbers = #tpu.dot_dimension_numbers<[1], [0], [0], [1], [0, 0, 1, 1], [], []>} : vector<8x32xf32>, vector<32x128xf32>, vector<8x128xf32> -> vector<8x128xf32>
    %c0_5 = arith.constant 0 : index
    %c0_6 = arith.constant 0 : index
    %4 = vector.load %arg4[%c0_5, %c0_6] : memref<32x128xf32, #tpu.memory_space<vmem>>, vector<32x128xf32>
    %cst_7 = arith.constant dense<0.000000e+00> : vector<8x128xf32>
    %5 = tpu.matmul %1, %4, %cst_7 {dimension_numbers = #tpu.dot_dimension_numbers<[1], [0], [0], [1], [0, 0, 1, 1], [], []>} : vector<8x32xf32>, vector<32x128xf32>, vector<8x128xf32> -> vector<8x128xf32>
    %6 = vector.extract_strided_slice %3 {offsets = [0, 0], sizes = [8, 32], strides = [1, 1]} : vector<8x128xf32> to vector<8x32xf32>
    %7 = vector.extract_strided_slice %5 {offsets = [0, 0], sizes = [8, 32], strides = [1, 1]} : vector<8x128xf32> to vector<8x32xf32>
    %8 = arith.addf %6, %7 : vector<8x32xf32>
    %c0_8 = arith.constant 0 : index
    %c0_9 = arith.constant 0 : index
    %9 = vector.load %arg5[%c0_8, %c0_9] : memref<1x32xf32, #tpu.memory_space<vmem>>, vector<1x32xf32>
    %10 = vector.broadcast %9 : vector<1x32xf32> to vector<8x32xf32>
    %11 = arith.addf %8, %10 : vector<8x32xf32>
    %cst_10 = arith.constant dense<0xFF800000> : vector<8xf32>
    %12 = vector.multi_reduction <maximumf>, %11, %cst_10 [1] : vector<8x32xf32> to vector<8xf32>
    %13 = vector.shape_cast %12 : vector<8xf32> to vector<8x1xf32>
    %14 = vector.broadcast %13 : vector<8x1xf32> to vector<8x32xf32>
    %15 = arith.subf %11, %14 : vector<8x32xf32>
    %16 = math.exp %15 : vector<8x32xf32>
    %cst_11 = arith.constant dense<0.000000e+00> : vector<8xf32>
    %17 = vector.multi_reduction <add>, %16, %cst_11 [1] : vector<8x32xf32> to vector<8xf32>
    %18 = vector.shape_cast %17 : vector<8xf32> to vector<8x1xf32>
    %19 = tpu.reciprocal %18 : vector<8x1xf32> -> vector<8x1xf32>
    %20 = vector.extract_strided_slice %16 {offsets = [0, 0], sizes = [8, 1], strides = [1, 1]} : vector<8x32xf32> to vector<8x1xf32>
    %21 = arith.mulf %20, %19 : vector<8x1xf32>
    %22 = vector.extract_strided_slice %16 {offsets = [0, 1], sizes = [8, 1], strides = [1, 1]} : vector<8x32xf32> to vector<8x1xf32>
    %23 = arith.mulf %22, %19 : vector<8x1xf32>
    %24 = vector.broadcast %21 : vector<8x1xf32> to vector<8x32xf32>
    %25 = arith.mulf %0, %24 : vector<8x32xf32>
    %c0_12 = arith.constant 0 : index
    %c0_13 = arith.constant 0 : index
    %26 = vector.load %arg8[%c0_12, %c0_13] : memref<8x64xf32, #tpu.memory_space<vmem>>, vector<8x32xf32>
    tpu.vector_store %arg8[%c0_12, %c0_13], %25 {strides = array<i32>} : memref<8x64xf32, #tpu.memory_space<vmem>>, vector<8x32xf32>,
    %27 = vector.broadcast %23 : vector<8x1xf32> to vector<8x32xf32>
    %28 = arith.mulf %1, %27 : vector<8x32xf32>
    %c0_14 = arith.constant 0 : index
    %c32 = arith.constant 32 : index
    %29 = vector.load %arg8[%c0_14, %c32] : memref<8x64xf32, #tpu.memory_space<vmem>>, vector<8x32xf32>
    tpu.vector_store %arg8[%c0_14, %c32], %28 {strides = array<i32>} : memref<8x64xf32, #tpu.memory_space<vmem>>, vector<8x32xf32>,
    %30 = vector.extract_strided_slice %3 {offsets = [0, 32], sizes = [8, 2], strides = [1, 1]} : vector<8x128xf32> to vector<8x2xf32>
    %31 = vector.broadcast %21 : vector<8x1xf32> to vector<8x2xf32>
    %32 = arith.mulf %31, %30 : vector<8x2xf32>
    %33 = vector.extract_strided_slice %5 {offsets = [0, 32], sizes = [8, 2], strides = [1, 1]} : vector<8x128xf32> to vector<8x2xf32>
    %34 = vector.broadcast %23 : vector<8x1xf32> to vector<8x2xf32>
    %35 = arith.mulf %34, %33 : vector<8x2xf32>
    %36 = arith.addf %32, %35 : vector<8x2xf32>
    %c0_15 = arith.constant 0 : index
    %c0_16 = arith.constant 0 : index
    %37 = vector.load %arg6[%c0_15, %c0_16] : memref<1x2xf32, #tpu.memory_space<vmem>>, vector<1x2xf32>
    %38 = vector.broadcast %37 : vector<1x2xf32> to vector<8x2xf32>
    %39 = arith.addf %36, %38 : vector<8x2xf32>
    %c0_17 = arith.constant 0 : index
    %c0_18 = arith.constant 0 : index
    %40 = vector.load %arg7[%c0_17, %c0_18] : memref<8x2xf32, #tpu.memory_space<vmem>>, vector<8x2xf32>
    tpu.vector_store %arg7[%c0_17, %c0_18], %39 {strides = array<i32>} : memref<8x2xf32, #tpu.memory_space<vmem>>, vector<8x2xf32>,
    return
  }
  func.func @transform_0(%arg0: i32) -> (i32, i32) {
    %c0_i32 = arith.constant 0 : i32
    %c0_i32_0 = arith.constant 0 : i32
    return %arg0, %c0_i32 : i32, i32
  }
  func.func @transform_1(%arg0: i32) -> (i32, i32) {
    %c0_i32 = arith.constant 0 : i32
    %c0_i32_0 = arith.constant 0 : i32
    return %arg0, %c0_i32 : i32, i32
  }
  func.func @transform_2(%arg0: i32) -> (i32, i32) {
    %c0_i32 = arith.constant 0 : i32
    %c0_i32_0 = arith.constant 0 : i32
    %c0_i32_1 = arith.constant 0 : i32
    return %c0_i32, %c0_i32_0 : i32, i32
  }
  func.func @transform_3(%arg0: i32) -> (i32, i32) {
    %c0_i32 = arith.constant 0 : i32
    %c0_i32_0 = arith.constant 0 : i32
    %c0_i32_1 = arith.constant 0 : i32
    return %c0_i32, %c0_i32_0 : i32, i32
  }
  func.func @transform_4(%arg0: i32) -> (i32, i32) {
    %c0_i32 = arith.constant 0 : i32
    %c0_i32_0 = arith.constant 0 : i32
    %c0_i32_1 = arith.constant 0 : i32
    return %c0_i32, %c0_i32_0 : i32, i32
  }
  func.func @transform_5(%arg0: i32) -> (i32, i32) {
    %c0_i32 = arith.constant 0 : i32
    %c0_i32_0 = arith.constant 0 : i32
    %c0_i32_1 = arith.constant 0 : i32
    return %c0_i32, %c0_i32_0 : i32, i32
  }
  func.func @transform_6(%arg0: i32) -> (i32, i32) {
    %c0_i32 = arith.constant 0 : i32
    %c0_i32_0 = arith.constant 0 : i32
    return %arg0, %c0_i32 : i32, i32
  }
  func.func @transform_7(%arg0: i32) -> (i32, i32) {
    %c0_i32 = arith.constant 0 : i32
    %c0_i32_0 = arith.constant 0 : i32
    return %arg0, %c0_i32 : i32, i32
  }
}

</mosaic_0001>

<llo_original>
// kernel: tpu_custom_call.1
$region0: #{tpu_custom_call.1}
  #allocation0 [shape = 'u32[]', space=smem, size = 0x4, offset = 0x4, fixed_abs, tag = 'smem constant byte address 0x4 - core index']
  #allocation1 [shape = 'u32[144,128]{1,0:T(1,128)}', space=vmem, size = 0x12000, scoped, tag = 'internal scratch']
  %s0 = inlined_call_operand.hbm [shape: f32[8,32], index: 0, kind: input, shape index: {}]
  %s1 = inlined_call_operand.hbm [shape: f32[8,32], index: 1, kind: input, shape index: {}]
  %s2 = inlined_call_operand.hbm [shape: f32[32,128], index: 2, kind: input, shape index: {}]
  %s3 = inlined_call_operand.hbm [shape: f32[32,128], index: 3, kind: input, shape index: {}]
  %s4 = inlined_call_operand.vmem [shape: f32[1,32], index: 4, kind: input, shape index: {}]
  %s5 = inlined_call_operand.vmem [shape: f32[1,2], index: 5, kind: input, shape index: {}]
  %s6 = inlined_call_operand.vmem [shape: f32[8,2], index: 6, kind: output, shape index: {0}]
  %s7 = inlined_call_operand.hbm [shape: f32[8,64], index: 7, kind: output, shape index: {1}]
  %8 = xla_tuple %s6, %s7
  %s9 = sld [smem:[#allocation0]]
  $region58: #{tpu_custom_call.1} parent=0
    _
  %s11 = ssub.s32 1, %s9
  %s12 = scalar_select 0, %s11, %s9
  $region1: #{tpu_custom_call.1} parent=0
    #allocation2 [shape = 'u8[4096]{0}', space=vmem, size = 0x1000, scoped, tag = 'input window, operand 0, single buffered']
    #allocation3 [shape = 's32[1]{0}', space=sflag, size = 0x4, scoped, tag = 'scoped memory for tpu_custom_call.1']
    #allocation4 [shape = 's32[1]{0}', space=sflag, size = 0x4, scoped, tag = 'scoped memory for tpu_custom_call.1']
    #allocation5 [shape = 'u8[4096]{0}', space=vmem, size = 0x1000, scoped, tag = 'input window, operand 1, single buffered']
    #allocation6 [shape = 's32[1]{0}', space=sflag, size = 0x4, scoped, tag = 'scoped memory for tpu_custom_call.1']
    #allocation7 [shape = 'u8[16384]{0}', space=vmem, size = 0x4000, scoped, tag = 'input window, operand 2, single buffered']
    #allocation8 [shape = 'u8[16384]{0}', space=vmem, size = 0x4000, scoped, tag = 'input window, operand 3, single buffered']
    #allocation9 [shape = 's32[1]{0}', space=sflag, size = 0x4, scoped, tag = 'scoped memory for tpu_custom_call.1']
    #allocation10 [shape = 'u8[4096]{0}', space=vmem, size = 0x1000, scoped, tag = 'output window, operand 1, single buffered']
    %13 = vsyncpa [#allocation3], 0
    %14 = vsyncpa [#allocation6], 0
    %15 = vsyncpa [#allocation9], 0
    %16 = vsyncpa [#allocation4], 0
    // Predicated region
    $region2: #{tpu_custom_call.1} parent=1 // pred_check
      _
    $region3: #{tpu_custom_call.1} parent=1 // pred_check_branch
      %18 = sbr.rel (0) target = $region5
    $region4: #{tpu_custom_call.1} parent=1 // pred_region
      %s20 = ssub.s32 128, 128
      %21 = vsyncadd [#allocation3], %s20
      %s23 = sshll.u32 [#allocation2], 4
      %s24 = int_to_ptr.vmem [resolvable:$true] %s23
      %26 = dma.hbm_to_vmem [thread:$0]  %s0, 128, %s24, [#allocation3]
    $region5: #{tpu_custom_call.1} parent=1 // pred_fallthru
      _
    // Predicated region
    $region6: #{tpu_custom_call.1} parent=1 // pred_check
      _
    $region7: #{tpu_custom_call.1} parent=1 // pred_check_branch
      %28 = sbr.rel (0) target = $region9
    $region8: #{tpu_custom_call.1} parent=1 // pred_region
      %s30 = ssub.s32 128, 128
      %31 = vsyncadd [#allocation6], %s30
      %s33 = sshll.u32 [#allocation5], 4
      %s34 = int_to_ptr.vmem [resolvable:$true] %s33
      %36 = dma.hbm_to_vmem [thread:$0]  %s1, 128, %s34, [#allocation6]
    $region9: #{tpu_custom_call.1} parent=1 // pred_fallthru
      _
    // Predicated region
    $region10: #{tpu_custom_call.1} parent=1 // pred_check
      _
    $region11: #{tpu_custom_call.1} parent=1 // pred_check_branch
      %38 = sbr.rel (0) target = $region13
    $region12: #{tpu_custom_call.1} parent=1 // pred_region
      %s40 = ssub.s32 512, 512
      %41 = vsyncadd [#allocation6], %s40
      %s42 = sshll.u32 [#allocation7], 4
      %s43 = int_to_ptr.vmem [resolvable:$true] %s42
      %48 = dma.hbm_to_vmem [thread:$0]  %s2, 512, %s43, [#allocation6], 128, 128, 8
    $region13: #{tpu_custom_call.1} parent=1 // pred_fallthru
      _
    // Predicated region
    $region14: #{tpu_custom_call.1} parent=1 // pred_check
      _
    $region15: #{tpu_custom_call.1} parent=1 // pred_check_branch
      %50 = sbr.rel (0) target = $region17
    $region16: #{tpu_custom_call.1} parent=1 // pred_region
      %s52 = ssub.s32 512, 512
      %53 = vsyncadd [#allocation9], %s52
      %s54 = sshll.u32 [#allocation8], 4
      %s55 = int_to_ptr.vmem [resolvable:$true] %s54
      %60 = dma.hbm_to_vmem [thread:$0]  %s3, 512, %s55, [#allocation9], 128, 128, 8
    $region17: #{tpu_custom_call.1} parent=1 // pred_fallthru
      _
    // Predicated region
    $region18: #{tpu_custom_call.1} parent=1 // pred_check
      _
    $region19: #{tpu_custom_call.1} parent=1 // pred_check_branch
      %62 = sbr.rel (0) target = $region21
    $region20: #{tpu_custom_call.1} parent=1 // pred_region
      _
    $region21: #{tpu_custom_call.1} parent=1 // pred_fallthru
      _
    // Predicated region
    $region22: #{tpu_custom_call.1} parent=1 // pred_check
      _
    $region23: #{tpu_custom_call.1} parent=1 // pred_check_branch
      %64 = sbr.rel (0) target = $region25
    $region24: #{tpu_custom_call.1} parent=1 // pred_region
      _
    $region25: #{tpu_custom_call.1} parent=1 // pred_fallthru
      _
    // Predicated region
    $region26: #{tpu_custom_call.1} parent=1 // pred_check
      _
    $region27: #{tpu_custom_call.1} parent=1 // pred_check_branch
      %66 = sbr.rel (0) target = $region29
    $region28: #{tpu_custom_call.1} parent=1 // pred_region
      %67 = dma.done [#allocation3], 128
    $region29: #{tpu_custom_call.1} parent=1 // pred_fallthru
      _
    // Predicated region
    $region30: #{tpu_custom_call.1} parent=1 // pred_check
      _
    $region31: #{tpu_custom_call.1} parent=1 // pred_check_branch
      %69 = sbr.rel (0) target = $region33
    $region32: #{tpu_custom_call.1} parent=1 // pred_region
      %70 = dma.done [#allocation6], 128
    $region33: #{tpu_custom_call.1} parent=1 // pred_fallthru
      _
    // Predicated region
    $region34: #{tpu_custom_call.1} parent=1 // pred_check
      _
    $region35: #{tpu_custom_call.1} parent=1 // pred_check_branch
      %72 = sbr.rel (0) target = $region37
    $region36: #{tpu_custom_call.1} parent=1 // pred_region
      %73 = dma.done [#allocation6], 512
    $region37: #{tpu_custom_call.1} parent=1 // pred_fallthru
      _
    // Predicated region
    $region38: #{tpu_custom_call.1} parent=1 // pred_check
      _
    $region39: #{tpu_custom_call.1} parent=1 // pred_check_branch
      %75 = sbr.rel (0) target = $region41
    $region40: #{tpu_custom_call.1} parent=1 // pred_region
      %76 = dma.done [#allocation9], 512
    $region41: #{tpu_custom_call.1} parent=1 // pred_fallthru
      _
    %v77 = vld [vmem:[#allocation2] sm:$0xff]
    %v78 = vld [vmem:[#allocation5] sm:$0xff]
    %v79 = vld [vmem:[#allocation7] sm:$0xff]
    %v80 = vld [vmem:[#allocation7 + $0x8] sm:$0xff]
    %v81 = vld [vmem:[#allocation7 + $0x10] sm:$0xff]
    %v82 = vld [vmem:[#allocation7 + $0x18] sm:$0xff]
    %vm83 = vcmask 261120
    %v85 = vsel %vm83, %v77, 0
    %87 = vmatprep.subr.mxu0 0.0
    %88 = vmatpush1.msra.mxu0 %v79
    %89 = vmatprep.subr.mxu0 0.0
    %90 = vmatpush1.msra.mxu0 %v80
    %91 = vmatprep.subr.mxu0 0.0
    %92 = vmatpush1.msra.mxu0 %v81
    %93 = vmatprep.subr.mxu0 0.0
    %94 = vmatpush1.msra.mxu0 %v82
    %95 = vmatprep.subr.mxu0 0.0
    %96 = vmatpush1.msra.mxu0 0.0
    %97 = vmatprep.subr.mxu0 0.0
    %98 = vmatpush1.msra.mxu0 0.0
    %99 = vmatprep.subr.mxu0 0.0
    %100 = vmatpush1.msra.mxu0 0.0
    %101 = vmatprep.subr.mxu0 0.0
    %102 = vmatpush1.msra.mxu0 0.0
    %103 = vmatprep.subr.mxu0 0.0
    %104 = vmatpush1.msra.mxu0 0.0
    %105 = vmatprep.subr.mxu0 0.0
    %106 = vmatpush1.msra.mxu0 0.0
    %107 = vmatprep.subr.mxu0 0.0
    %108 = vmatpush1.msra.mxu0 0.0
    %109 = vmatprep.subr.mxu0 0.0
    %110 = vmatpush1.msra.mxu0 0.0
    %111 = vmatprep.subr.mxu0 0.0
    %112 = vmatpush1.msra.mxu0 0.0
    %113 = vmatprep.subr.mxu0 0.0
    %114 = vmatpush1.msra.mxu0 0.0
    %115 = vmatprep.subr.mxu0 0.0
    %116 = vmatpush1.msra.mxu0 0.0
    %117 = vmatprep.subr.mxu0 0.0
    %118 = vmatpush1.msra.mxu0 0.0
    %119 = vmatprep.subr.mxu0 0.0
    %120 = vmatpush1.msra.mxu0 0.0
    %121 = vmatprep.subr.mxu0 0.0
    %122 = vmatpush1.msra.mxu0 0.0
    %123 = vmatprep.subr.mxu0 0.0
    %124 = vmatpush1.msra.mxu0 0.0
    %125 = vmatprep.subr.mxu0 0.0
    %126 = vmatpush1.msra.mxu0 0.0
    %127 = vmatprep.subr.mxu0 0.0
    %128 = vmatpush1.msra.mxu0 0.0
    %129 = vmatprep.subr.mxu0 0.0
    %130 = vmatpush1.msra.mxu0 0.0
    %131 = vmatprep.subr.mxu0 0.0
    %132 = vmatpush1.msra.mxu0 0.0
    %133 = vmatprep.subr.mxu0 0.0
    %134 = vmatpush1.msra.mxu0 0.0
    %135 = vmatprep.subr.mxu0 0.0
    %136 = vmatpush1.msra.mxu0 0.0
    %137 = vmatprep.subr.mxu0 0.0
    %138 = vmatpush1.msra.mxu0 0.0
    %139 = vmatprep.subr.mxu0 0.0
    %140 = vmatpush1.msra.mxu0 0.0
    %141 = vmatprep.subr.mxu0 0.0
    %142 = vmatpush1.msra.mxu0 0.0
    %143 = vmatprep.subr.mxu0 0.0
    %144 = vmatpush1.msra.mxu0 0.0
    %145 = vmatprep.subr.mxu0 0.0
    %146 = vmatpush1.msra.mxu0 0.0
    %147 = vmatprep.subr.mxu0 0.0
    %148 = vmatpush1.msra.mxu0 0.0
    %149 = vmatprep.subr.mxu0 0.0
    %150 = vmatpush1.msra.mxu0 0.0
    %151 = vmatprep.mubr.f32.mxu0 0.0
    %152 = vmatmul.mubr.f32.gmra.mrb[0].mxu0 %v85
    %v153 = vpop.f32.mrb[0].mxu0
    %v154 = vadd.f32 0.0, %v153
    %v155 = vpop.f32.mrb[0].mxu0
    %156 = vdwg.mxu0
    %v157 = vld [vmem:[#allocation8] sm:$0xff]
    %v158 = vld [vmem:[#allocation8 + $0x8] sm:$0xff]
    %v159 = vld [vmem:[#allocation8 + $0x10] sm:$0xff]
    %v160 = vld [vmem:[#allocation8 + $0x18] sm:$0xff]
    %v162 = vsel %vm83, %v78, 0
    %164 = vmatprep.subr.mxu0 0.0
    %165 = vmatpush1.msra.mxu0 %v157
    %166 = vmatprep.subr.mxu0 0.0
    %167 = vmatpush1.msra.mxu0 %v158
    %168 = vmatprep.subr.mxu0 0.0
    %169 = vmatpush1.msra.mxu0 %v159
    %170 = vmatprep.subr.mxu0 0.0
    %171 = vmatpush1.msra.mxu0 %v160
    %172 = vmatprep.subr.mxu0 0.0
    %173 = vmatpush1.msra.mxu0 0.0
    %174 = vmatprep.subr.mxu0 0.0
    %175 = vmatpush1.msra.mxu0 0.0
    %176 = vmatprep.subr.mxu0 0.0
    %177 = vmatpush1.msra.mxu0 0.0
    %178 = vmatprep.subr.mxu0 0.0
    %179 = vmatpush1.msra.mxu0 0.0
    %180 = vmatprep.subr.mxu0 0.0
    %181 = vmatpush1.msra.mxu0 0.0
    %182 = vmatprep.subr.mxu0 0.0
    %183 = vmatpush1.msra.mxu0 0.0
    %184 = vmatprep.subr.mxu0 0.0
    %185 = vmatpush1.msra.mxu0 0.0
    %186 = vmatprep.subr.mxu0 0.0
    %187 = vmatpush1.msra.mxu0 0.0
    %188 = vmatprep.subr.mxu0 0.0
    %189 = vmatpush1.msra.mxu0 0.0
    %190 = vmatprep.subr.mxu0 0.0
    %191 = vmatpush1.msra.mxu0 0.0
    %192 = vmatprep.subr.mxu0 0.0
    %193 = vmatpush1.msra.mxu0 0.0
    %194 = vmatprep.subr.mxu0 0.0
    %195 = vmatpush1.msra.mxu0 0.0
    %196 = vmatprep.subr.mxu0 0.0
    %197 = vmatpush1.msra.mxu0 0.0
    %198 = vmatprep.subr.mxu0 0.0
    %199 = vmatpush1.msra.mxu0 0.0
    %200 = vmatprep.subr.mxu0 0.0
    %201 = vmatpush1.msra.mxu0 0.0
    %202 = vmatprep.subr.mxu0 0.0
    %203 = vmatpush1.msra.mxu0 0.0
    %204 = vmatprep.subr.mxu0 0.0
    %205 = vmatpush1.msra.mxu0 0.0
    %206 = vmatprep.subr.mxu0 0.0
    %207 = vmatpush1.msra.mxu0 0.0
    %208 = vmatprep.subr.mxu0 0.0
    %209 = vmatpush1.msra.mxu0 0.0
    %210 = vmatprep.subr.mxu0 0.0
    %211 = vmatpush1.msra.mxu0 0.0
    %212 = vmatprep.subr.mxu0 0.0
    %213 = vmatpush1.msra.mxu0 0.0
    %214 = vmatprep.subr.mxu0 0.0
    %215 = vmatpush1.msra.mxu0 0.0
    %216 = vmatprep.subr.mxu0 0.0
    %217 = vmatpush1.msra.mxu0 0.0
    %218 = vmatprep.subr.mxu0 0.0
    %219 = vmatpush1.msra.mxu0 0.0
    %220 = vmatprep.subr.mxu0 0.0
    %221 = vmatpush1.msra.mxu0 0.0
    %222 = vmatprep.subr.mxu0 0.0
    %223 = vmatpush1.msra.mxu0 0.0
    %224 = vmatprep.subr.mxu0 0.0
    %225 = vmatpush1.msra.mxu0 0.0
    %226 = vmatprep.subr.mxu0 0.0
    %227 = vmatpush1.msra.mxu0 0.0
    %228 = vmatprep.mubr.f32.mxu0 0.0
    %229 = vmatmul.mubr.f32.gmra.mrb[0].mxu0 %v162
    %v230 = vpop.f32.mrb[0].mxu0
    %v231 = vadd.f32 0.0, %v230
    %v232 = vpop.f32.mrb[0].mxu0
    %233 = vdwg.mxu0
    %v234 = vadd.f32 %v154, %v231
    %v235 = vld [vmem:[%s4] sm:$0x1]
    %v237 = vlaneseq
    %v238 = vshrl.u32 %v237, 7
    %v239 = vsub.s32 0, %v238
    %v240 = vrot.slane %v235, %v239
    %v242 = vadd.f32 %v234, %v240
    %v243 = vsel %vm83, %v242, -inf
    %244 = vmax.xlane.f32.xlu0 %v243
    %v245 = vpop.xlane.xlu0 %244
    %v246 = vsub.f32 %v242, %v245
    %v247 = vmul.f32 %v246, 1.442695
    %v248 = vpow.pop %v247
    %v249 = vsel %vm83, %v248, 0.0
    %250 = vadd.xlane.f32.xlu0 %v249
    %v251 = vpop.xlane.xlu0 %250
    %v252 = vrcp.pop %v251
    %v253 = vmul.f32 %v248, %v252
    %255 = vset.pattern.permute.xlu0 0
    %256 = vperm.xlu0 %255, %v253
    %v257 = vpop.permute.xlu0 %256
    %v259 = vmul.f32 %v77, %v257
    %260 = vst.msk [vmem:[#allocation10] sm:$0xff] %vm83, %v259
    %261 = vset.pattern.permute.xlu0 1
    %262 = vperm.xlu0 %261, %v253
    %v263 = vpop.permute.xlu0 %262
    %v265 = vmul.f32 %v78, %v263
    %267 = vrot.lane.b32.xlu0 %v265, 32
    %v268 = vpop.permute.xlu0 %267
    %vm270 = vcmask 523520
    %271 = vst.msk [vmem:[#allocation10] sm:$0xff] %vm270, %v268
    %v272 = vmul.f32 %v257, %v154
    %v273 = vmul.f32 %v263, %v231
    %v274 = vadd.f32 %v272, %v273
    %v275 = vld [vmem:[%s5] sm:$0x1]
    %v277 = vlaneseq
    %v278 = vshrl.u32 %v277, 7
    %v279 = vsub.s32 0, %v278
    %v280 = vrot.slane %v275, %v279
    %281 = vrot.lane.b32.xlu0 %v280, 32
    %v282 = vpop.permute.xlu0 %281
    %v284 = vadd.f32 %v274, %v282
    %286 = vrot.lane.b32.xlu0 %v284, 96
    %v287 = vpop.permute.xlu0 %286
    %vm289 = vcmask 15360
    %290 = vst.msk [vmem:[%s6] sm:$0xff] %vm289, %v287
    // Predicated region
    $region42: #{tpu_custom_call.1} parent=1 // pred_check
      _
    $region43: #{tpu_custom_call.1} parent=1 // pred_check_branch
      %292 = sbr.rel (0) target = $region45
    $region44: #{tpu_custom_call.1} parent=1 // pred_region
      _
    $region45: #{tpu_custom_call.1} parent=1 // pred_fallthru
      _
    // Predicated region
    $region46: #{tpu_custom_call.1} parent=1 // pred_check
      _
    $region47: #{tpu_custom_call.1} parent=1 // pred_check_branch
      %294 = sbr.rel (0) target = $region49
    $region48: #{tpu_custom_call.1} parent=1 // pred_region
      %s296 = ssub.s32 128, 128
      %297 = vsyncadd [#allocation4], %s296
      %s299 = sshll.u32 [#allocation10], 4
      %s300 = int_to_ptr.vmem [resolvable:$true] %s299
      %302 = dma.vmem_to_hbm [thread:$0]  %s300, 128, %s7, [#allocation4]
    $region49: #{tpu_custom_call.1} parent=1 // pred_fallthru
      _
    // Predicated region
    $region50: #{tpu_custom_call.1} parent=1 // pred_check
      _
    $region51: #{tpu_custom_call.1} parent=1 // pred_check_branch
      %304 = sbr.rel (0) target = $region53
    $region52: #{tpu_custom_call.1} parent=1 // pred_region
      _
    $region53: #{tpu_custom_call.1} parent=1 // pred_fallthru
      _
    // Predicated region
    $region54: #{tpu_custom_call.1} parent=1 // pred_check
      _
    $region55: #{tpu_custom_call.1} parent=1 // pred_check_branch
      %306 = sbr.rel (0) target = $region57
    $region56: #{tpu_custom_call.1} parent=1 // pred_region
      %307 = dma.done [#allocation4], 128
    $region57: #{tpu_custom_call.1} parent=1 // pred_fallthru
      _
    %308 = vsyncpa [#allocation3], 1
    %309 = vsyncpa [#allocation6], 1
    %310 = vsyncpa [#allocation9], 1
    %311 = vsyncpa [#allocation4], 1

</llo_original>
